<compile_context>
chip_gen: v5e
topology: v5e:2x2
jax: 0.10.0
libtpu: 0.0.40
codegen_flags: <defaults>
</compile_context>

<pallas_src>
import functools

import jax
import jax.numpy as jnp
from jax import lax
from jax.experimental import pallas as pl
from jax.experimental.pallas import tpu as pltpu


def _window_predictor_kernel(x_ref, w1_ref, b1_ref, w2_ref, b2_ref, o_ref,
                             sum_ref, *, inv_s, seq_len, seq_tile,
                             mask_seq_tail):
    # x_ref: (TB, TS, D), w1_ref: (D, H), b1_ref: (1, H),
    # w2_ref: (H, 4), b2_ref: (1, 4), o_ref: (TB, 4), sum_ref: (TB, D) f32
    s = pl.program_id(1)

    @pl.when(s == 0)
    def _init():
        sum_ref[...] = jnp.zeros_like(sum_ref)

    # Accumulate the sequence-sum in float32 (x may arrive as bf16).
    xb = x_ref[...].astype(jnp.float32)
    if mask_seq_tail:
        # Ragged last S tile: zero the out-of-range sequence rows in-kernel
        # instead of padding x in HBM.
        pos = s * seq_tile + lax.broadcasted_iota(jnp.int32, xb.shape, 1)
        xb = jnp.where(pos < seq_len, xb, 0.0)
    sum_ref[...] += jnp.sum(xb, axis=1)

    @pl.when(s == pl.num_programs(1) - 1)
    def _finalize():
        # mean over seq, then cast to the weight dtype (bf16 by default) so
        # the MXU runs its native bf16 x bf16 -> f32 path.
        feats = (sum_ref[...] * inv_s).astype(w1_ref.dtype)      # (TB, D)

        # fc1 + ReLU (f32 accumulate)
        h = jnp.dot(feats, w1_ref[...],
                    preferred_element_type=jnp.float32) + b1_ref[...]
        h = jnp.maximum(h, 0.0).astype(w2_ref.dtype)             # (TB, H)

        # fc2 (f32 accumulate)
        wp = jnp.dot(h, w2_ref[...],
                     preferred_element_type=jnp.float32) + b2_ref[...]  # (TB, 4)

        # sigmoid(wp[:, :2]) * 0.4 + 0.3  |  sigmoid(wp[:, 2:]) * 0.3 + 0.3
        # Built from an in-kernel iota (no captured array constants).
        sig = jax.nn.sigmoid(wp)
        col = lax.broadcasted_iota(jnp.int32, wp.shape, 1)
        scale = jnp.where(col < 2, 0.4, 0.3)
        o_ref[...] = (sig * scale + 0.3).astype(o_ref.dtype)


def _choose_tiles(B, S, D, itemsize):
    """Pick (TB, TS): TB fills the MXU M dim, TS targets ~8 MiB x-blocks."""
    # Batch dim has no (8,128) alignment constraint (it is the 3rd-minor dim
    # of x); the output BlockSpec (TB, 4) is legal because TB == B (full dim)
    # when B <= 256 and a multiple of 8 otherwise.
    tb = min(B, 256)
    budget = 8 * 1024 * 1024                      # per x buffer (x2 buffered)
    ts_max = max(1, budget // max(1, tb * D * itemsize))
    if ts_max >= S:
        ts = S                                    # full seq dim -> always legal
    else:
        ts = max(8, (ts_max // 8) * 8)            # keep sublane-aligned tiles
    return tb, ts


def window_predictor_forward(x, w1, b1, w2, b2, *, weight_dtype=jnp.bfloat16):
    """x: (B, S, D) f32/bf16 -> (B, 4) float32. Eval mode (no noise).

    Weights are streamed/stored in `weight_dtype` (bf16 by default: halves
    resident VMEM and weight HBM fetch, uses the MXU bf16 path); matmul
    accumulation and the sequence-sum accumulator stay float32.
    """
    B, S, D = x.shape
    H = w1.shape[1]

    w1 = w1.astype(weight_dtype)
    w2 = w2.astype(weight_dtype)
    b1 = jnp.asarray(b1, jnp.float32).reshape(1, H)
    b2 = jnp.asarray(b2, jnp.float32).reshape(1, 4)

    tb, ts = _choose_tiles(B, S, D, x.dtype.itemsize)
    grid = (pl.cdiv(B, tb), pl.cdiv(S, ts))
    mask_seq_tail = (S % ts) != 0

    kernel = functools.partial(
        _window_predictor_kernel,
        inv_s=float(1.0 / S), seq_len=S, seq_tile=ts,
        mask_seq_tail=mask_seq_tail)

    # VMEM budget derived from the actual tile plan:
    #   x: 2 buffers, weights/biases: 1 buffer each, (tb, D) f32 accumulator,
    #   small double-buffered output, plus headroom.
    wbytes = jnp.dtype(weight_dtype).itemsize
    x_block_bytes = tb * ts * D * x.dtype.itemsize
    weight_bytes = (D * H + H * 4) * wbytes + (H + 4) * 4
    acc_bytes = tb * D * 4
    out_bytes = 2 * tb * 4 * 4
    need = 2 * x_block_bytes + weight_bytes + acc_bytes + out_bytes
    vmem_limit = int(min(max(int(need * 1.25) + (4 << 20), 32 << 20), 64 << 20))

    out = pl.pallas_call(
        kernel,
        out_shape=jax.ShapeDtypeStruct((B, 4), jnp.float32),
        grid_spec=pltpu.PrefetchScalarGridSpec(
            num_scalar_prefetch=0,
            grid=grid,
            in_specs=[
                # x: streamed tile-by-tile (double-buffered DMA).
                pl.BlockSpec((tb, ts, D), lambda b, s: (b, s, 0)),
                # Weights/biases: constant index_maps -> resident in VMEM,
                # single-buffered (no re-DMA ever needed).
                pl.BlockSpec((D, H), lambda b, s: (0, 0),
                             pipeline_mode=pl.Buffered(1)),
                pl.BlockSpec((1, H), lambda b, s: (0, 0),
                             pipeline_mode=pl.Buffered(1)),
                pl.BlockSpec((H, 4), lambda b, s: (0, 0),
                             pipeline_mode=pl.Buffered(1)),
                pl.BlockSpec((1, 4), lambda b, s: (0, 0),
                             pipeline_mode=pl.Buffered(1)),
            ],
            out_specs=pl.BlockSpec((tb, 4), lambda b, s: (b, 0)),
            scratch_shapes=[pltpu.VMEM((tb, D), jnp.float32)],
        ),
        compiler_params=pltpu.CompilerParams(
            # Batch axis parallel (v7x 2-TC sharding), reduction axis arbitrary.
            dimension_semantics=("parallel", "arbitrary"),
            vmem_limit_bytes=vmem_limit,
        ),
    )(x, w1, b1, w2, b2)
    return out


def init_params(key, d_model):
    """Mirror the torch module's __init__ (fc2 bias fixed, fc2 weight * 0.1)."""
    hidden = d_model // 2
    k1, k2, k3 = jax.random.split(key, 3)

    bound1 = 1.0 / jnp.sqrt(d_model)
    w1 = jax.random.uniform(k1, (d_model, hidden), jnp.float32, -bound1, bound1)
    b1 = jax.random.uniform(k2, (1, hidden), jnp.float32, -bound1, bound1)

    bound2 = 1.0 / jnp.sqrt(hidden)
    w2 = jax.random.uniform(k3, (hidden, 4), jnp.float32, -bound2, bound2) * 0.1
    b2 = jnp.array([[0.5, 0.5, 0.4, 0.4]], dtype=jnp.float32)
    return w1, b1, w2, b2


def reference_forward(x, w1, b1, w2, b2, weight_dtype=jnp.float32):
    """Pure-JAX reference; weight_dtype lets us match the kernel's precision."""
    feats = jnp.mean(x.astype(jnp.float32), axis=1)
    h = jnp.dot(feats.astype(weight_dtype), w1.astype(weight_dtype),
                preferred_element_type=jnp.float32) + b1
    h = jnp.maximum(h, 0.0)
    wp = jnp.dot(h.astype(weight_dtype), w2.astype(weight_dtype),
                 preferred_element_type=jnp.float32) + b2
    center = jax.nn.sigmoid(wp[:, :2]) * 0.4 + 0.3
    size = jax.nn.sigmoid(wp[:, 2:]) * 0.3 + 0.3
    return jnp.concatenate([center, size], axis=1)


if __name__ == "__main__":
    B, S, D = 2, 8, 32  # batch, seq, d_model
    key = jax.random.PRNGKey(0)
    kx, kp = jax.random.split(key)

    x = jax.random.normal(kx, (B, S, D), dtype=jnp.float32)
    w1, b1, w2, b2 = init_params(kp, D)

    out = window_predictor_forward(x, w1, b1, w2, b2)
    out = jax.block_until_ready(out)
    assert out.shape == (B, 4)

    # Matched-precision (bf16 weights) reference: tight tolerance.
    ref_bf16 = reference_forward(x, w1, b1, w2, b2, weight_dtype=jnp.bfloat16)
    assert jnp.allclose(out, ref_bf16, atol=1e-4, rtol=1e-4)

    # Full-f32 reference: loose sanity check (bf16 weight rounding only).
    ref_f32 = reference_forward(x, w1, b1, w2, b2, weight_dtype=jnp.float32)
    assert jnp.allclose(out, ref_f32, atol=5e-3, rtol=5e-3)

    print("KERNEL_OK")
</pallas_src>

<mosaic_0001>
module attributes {stable_mosaic.version = 11 : i64} {
  func.func @_window_predictor_kernel(%arg0: i32, %arg1: i32, %arg2: memref<2x8x32xf32, #tpu.memory_space<vmem>>, %arg3: memref<32x16xbf16, #tpu.memory_space<vmem>>, %arg4: memref<1x16xf32, #tpu.memory_space<vmem>>, %arg5: memref<16x4xbf16, #tpu.memory_space<vmem>>, %arg6: memref<1x4xf32, #tpu.memory_space<vmem>>, %arg7: memref<2x4xf32, #tpu.memory_space<vmem>>, %arg8: memref<2x32xf32, #tpu.memory_space<vmem>>) attributes {dimension_semantics = [#tpu.dimension_semantics<parallel>, #tpu.dimension_semantics<arbitrary>], iteration_bounds = array<i64: 1, 1>, scalar_prefetch = 0 : i64, scratch_operands = 1 : i64, tpu.core_type = #tpu.core_type<tc>, window_params = [{transform_indices = @transform_0, window_bounds = array<i64: 2, 8, 32>}, {pipeline_mode = #tpu.pipeline_mode<synchronous>, transform_indices = @transform_1, window_bounds = array<i64: 32, 16>}, {pipeline_mode = #tpu.pipeline_mode<synchronous>, transform_indices = @transform_2, window_bounds = array<i64: 1, 16>}, {pipeline_mode = #tpu.pipeline_mode<synchronous>, transform_indices = @transform_3, window_bounds = array<i64: 16, 4>}, {pipeline_mode = #tpu.pipeline_mode<synchronous>, transform_indices = @transform_4, window_bounds = array<i64: 1, 4>}, {transform_indices = @transform_5, window_bounds = array<i64: 2, 4>}]} {
    %c0_i32 = arith.constant 0 : i32
    %0 = arith.cmpi eq, %arg1, %c0_i32 : i32
    %1 = arith.extui %0 : i1 to i32
    %c0_i32_0 = arith.constant 0 : i32
    %2 = arith.cmpi ne, %1, %c0_i32_0 : i32
    scf.if %2 {
      %cst_9 = arith.constant 0.000000e+00 : f32
      %11 = vector.broadcast %cst_9 : f32 to vector<2x32xf32>
      %c0_10 = arith.constant 0 : index
      %c0_11 = arith.constant 0 : index
      %12 = vector.load %arg8[%c0_10, %c0_11] : memref<2x32xf32, #tpu.memory_space<vmem>>, vector<2x32xf32>
      tpu.vector_store %arg8[%c0_10, %c0_11], %11 {strides = array<i32>} : memref<2x32xf32, #tpu.memory_space<vmem>>, vector<2x32xf32>,
    } else {
    }
    %c0 = arith.constant 0 : index
    %c0_1 = arith.constant 0 : index
    %c0_2 = arith.constant 0 : index
    %3 = vector.load %arg2[%c0, %c0_1, %c0_2] : memref<2x8x32xf32, #tpu.memory_space<vmem>>, vector<2x8x32xf32>
    %c0_3 = arith.constant 0 : index
    %c0_4 = arith.constant 0 : index
    %4 = vector.load %arg8[%c0_3, %c0_4] : memref<2x32xf32, #tpu.memory_space<vmem>>, vector<2x32xf32>
    %cst = arith.constant dense<0.000000e+00> : vector<2x32xf32>
    %5 = vector.multi_reduction <add>, %3, %cst [1] : vector<2x8x32xf32> to vector<2x32xf32>
    %6 = arith.addf %4, %5 : vector<2x32xf32>
    %c0_5 = arith.constant 0 : index
    %c0_6 = arith.constant 0 : index
    %7 = vector.load %arg8[%c0_5, %c0_6] : memref<2x32xf32, #tpu.memory_space<vmem>>, vector<2x32xf32>
    tpu.vector_store %arg8[%c0_5, %c0_6], %6 {strides = array<i32>} : memref<2x32xf32, #tpu.memory_space<vmem>>, vector<2x32xf32>,
    %c0_i32_7 = arith.constant 0 : i32
    %8 = arith.cmpi eq, %arg1, %c0_i32_7 : i32
    %9 = arith.extui %8 : i1 to i32
    %c0_i32_8 = arith.constant 0 : i32
    %10 = arith.cmpi ne, %9, %c0_i32_8 : i32
    scf.if %10 {
      %c0_9 = arith.constant 0 : index
      %c0_10 = arith.constant 0 : index
      %11 = vector.load %arg8[%c0_9, %c0_10] : memref<2x32xf32, #tpu.memory_space<vmem>>, vector<2x32xf32>
      %cst_11 = arith.constant 1.250000e-01 : f32
      %12 = vector.broadcast %cst_11 : f32 to vector<2x32xf32>
      %13 = arith.mulf %11, %12 : vector<2x32xf32>
      %14 = arith.truncf %13 : vector<2x32xf32> to vector<2x32xbf16>
      %c0_12 = arith.constant 0 : index
      %c0_13 = arith.constant 0 : index
      %15 = vector.load %arg3[%c0_12, %c0_13] : memref<32x16xbf16, #tpu.memory_space<vmem>>, vector<32x16xbf16>
      %cst_14 = arith.constant dense<0.000000e+00> : vector<2x16xf32>
      %16 = tpu.matmul %14, %15, %cst_14 {dimension_numbers = #tpu.dot_dimension_numbers<[1], [0], [0], [1], [0, 0, 1, 1], [], []>} : vector<2x32xbf16>, vector<32x16xbf16>, vector<2x16xf32> -> vector<2x16xf32>
      %c0_15 = arith.constant 0 : index
      %c0_16 = arith.constant 0 : index
      %17 = vector.load %arg4[%c0_15, %c0_16] : memref<1x16xf32, #tpu.memory_space<vmem>>, vector<1x16xf32>
      %18 = vector.broadcast %17 : vector<1x16xf32> to vector<2x16xf32>
      %19 = arith.addf %16, %18 : vector<2x16xf32>
      %cst_17 = arith.constant 0.000000e+00 : f32
      %20 = vector.broadcast %cst_17 : f32 to vector<2x16xf32>
      %21 = arith.maximumf %19, %20 : vector<2x16xf32>
      %22 = arith.truncf %21 : vector<2x16xf32> to vector<2x16xbf16>
      %c0_18 = arith.constant 0 : index
      %c0_19 = arith.constant 0 : index
      %23 = vector.load %arg5[%c0_18, %c0_19] : memref<16x4xbf16, #tpu.memory_space<vmem>>, vector<16x4xbf16>
      %cst_20 = arith.constant dense<0.000000e+00> : vector<2x4xf32>
      %24 = tpu.matmul %22, %23, %cst_20 {dimension_numbers = #tpu.dot_dimension_numbers<[1], [0], [0], [1], [0, 0, 1, 1], [], []>} : vector<2x16xbf16>, vector<16x4xbf16>, vector<2x4xf32> -> vector<2x4xf32>
      %c0_21 = arith.constant 0 : index
      %c0_22 = arith.constant 0 : index
      %25 = vector.load %arg6[%c0_21, %c0_22] : memref<1x4xf32, #tpu.memory_space<vmem>>, vector<1x4xf32>
      %26 = vector.broadcast %25 : vector<1x4xf32> to vector<2x4xf32>
      %27 = arith.addf %24, %26 : vector<2x4xf32>
      %28 = arith.negf %27 : vector<2x4xf32>
      %29 = math.exp %28 : vector<2x4xf32>
      %cst_23 = arith.constant 1.000000e+00 : f32
      %30 = vector.broadcast %cst_23 : f32 to vector<2x4xf32>
      %31 = arith.addf %30, %29 : vector<2x4xf32>
      %32 = arith.divf %30, %31 : vector<2x4xf32>
      %33 = tpu.iota {dimensions = array<i32: 1>} : vector<2x4xi32>
      %c2_i32 = arith.constant 2 : i32
      %34 = vector.broadcast %c2_i32 : i32 to vector<2x4xi32>
      %35 = arith.cmpi slt, %33, %34 : vector<2x4xi32>
      %cst_24 = arith.constant 4.000000e-01 : f32
      %cst_25 = arith.constant 3.000000e-01 : f32
      %36 = vector.broadcast %cst_24 : f32 to vector<2x4xf32>
      %37 = vector.broadcast %cst_25 : f32 to vector<2x4xf32>
      %38 = arith.select %35, %36, %37 : vector<2x4xi1>, vector<2x4xf32>
      %39 = arith.mulf %32, %38 : vector<2x4xf32>
      %cst_26 = arith.constant 3.000000e-01 : f32
      %40 = vector.broadcast %cst_26 : f32 to vector<2x4xf32>
      %41 = arith.addf %39, %40 : vector<2x4xf32>
      %c0_27 = arith.constant 0 : index
      %c0_28 = arith.constant 0 : index
      %42 = vector.load %arg7[%c0_27, %c0_28] : memref<2x4xf32, #tpu.memory_space<vmem>>, vector<2x4xf32>
      tpu.vector_store %arg7[%c0_27, %c0_28], %41 {strides = array<i32>} : memref<2x4xf32, #tpu.memory_space<vmem>>, vector<2x4xf32>,
    } else {
    }
    return
  }
  func.func @transform_0(%arg0: i32, %arg1: i32) -> (i32, i32, i32) {
    %c0_i32 = arith.constant 0 : i32
    %c0_i32_0 = arith.constant 0 : i32
    return %arg0, %arg1, %c0_i32 : i32, i32, i32
  }
  func.func @transform_1(%arg0: i32, %arg1: i32) -> (i32, i32) {
    %c0_i32 = arith.constant 0 : i32
    %c0_i32_0 = arith.constant 0 : i32
    %c0_i32_1 = arith.constant 0 : i32
    return %c0_i32, %c0_i32_0 : i32, i32
  }
  func.func @transform_2(%arg0: i32, %arg1: i32) -> (i32, i32) {
    %c0_i32 = arith.constant 0 : i32
    %c0_i32_0 = arith.constant 0 : i32
    %c0_i32_1 = arith.constant 0 : i32
    return %c0_i32, %c0_i32_0 : i32, i32
  }
  func.func @transform_3(%arg0: i32, %arg1: i32) -> (i32, i32) {
    %c0_i32 = arith.constant 0 : i32
    %c0_i32_0 = arith.constant 0 : i32
    %c0_i32_1 = arith.constant 0 : i32
    return %c0_i32, %c0_i32_0 : i32, i32
  }
  func.func @transform_4(%arg0: i32, %arg1: i32) -> (i32, i32) {
    %c0_i32 = arith.constant 0 : i32
    %c0_i32_0 = arith.constant 0 : i32
    %c0_i32_1 = arith.constant 0 : i32
    return %c0_i32, %c0_i32_0 : i32, i32
  }
  func.func @transform_5(%arg0: i32, %arg1: i32) -> (i32, i32) {
    %c0_i32 = arith.constant 0 : i32
    %c0_i32_0 = arith.constant 0 : i32
    return %arg0, %c0_i32 : i32, i32
  }
}

</mosaic_0001>

<llo_original>
// kernel: tpu_custom_call.1
$region0: #{tpu_custom_call.1}
  #allocation0 [shape = 'u32[]', space=smem, size = 0x4, offset = 0x4, fixed_abs, tag = 'smem constant byte address 0x4 - core index']
  #allocation1 [shape = 'u32[72,128]{1,0:T(1,128)}', space=vmem, size = 0x9000, scoped, tag = 'internal scratch']
  #allocation2 [shape = 'f32[2,32]{1,0:T(2,128)}', space=vmem, size = 0x400, scoped, tag = 'scratch operand']
  %s0 = inlined_call_operand.vmem [shape: f32[2,8,32], index: 0, kind: input, shape index: {}]
  %s1 = inlined_call_operand.vmem [shape: bf16[32,16], index: 1, kind: input, shape index: {}]
  %s2 = inlined_call_operand.vmem [shape: f32[1,16], index: 2, kind: input, shape index: {}]
  %s3 = inlined_call_operand.vmem [shape: bf16[16,4], index: 3, kind: input, shape index: {}]
  %s4 = inlined_call_operand.vmem [shape: f32[1,4], index: 4, kind: input, shape index: {}]
  %s5 = inlined_call_operand.hbm [shape: f32[2,4], index: 5, kind: output, shape index: {}]
  %s6 = sld [smem:[#allocation0]]
  $region38: #{tpu_custom_call.1} parent=0
    _
  %s8 = ssub.s32 1, %s6
  %s9 = scalar_select 0, %s8, %s6
  $region1: #{tpu_custom_call.1} parent=0
    #allocation3 [shape = 'u8[1024]{0}', space=vmem, size = 0x400, scoped, tag = 'output window, operand 0, single buffered']
    #allocation4 [shape = 's32[1]{0}', space=sflag, size = 0x4, scoped, tag = 'scoped memory for tpu_custom_call.1']
    %10 = vsyncpa [#allocation4], 0
    // Predicated region
    $region2: #{tpu_custom_call.1} parent=1 // pred_check
      _
    $region3: #{tpu_custom_call.1} parent=1 // pred_check_branch
      %12 = sbr.rel (0) target = $region5
    $region4: #{tpu_custom_call.1} parent=1 // pred_region
      _
    $region5: #{tpu_custom_call.1} parent=1 // pred_fallthru
      _
    // Predicated region
    $region6: #{tpu_custom_call.1} parent=1 // pred_check
      _
    $region7: #{tpu_custom_call.1} parent=1 // pred_check_branch
      %14 = sbr.rel (0) target = $region9
    $region8: #{tpu_custom_call.1} parent=1 // pred_region
      _
    $region9: #{tpu_custom_call.1} parent=1 // pred_fallthru
      _
    // Predicated region
    $region10: #{tpu_custom_call.1} parent=1 // pred_check
      _
    $region11: #{tpu_custom_call.1} parent=1 // pred_check_branch
      %16 = sbr.rel (0) target = $region13
    $region12: #{tpu_custom_call.1} parent=1 // pred_region
      _
    $region13: #{tpu_custom_call.1} parent=1 // pred_fallthru
      _
    // Predicated region
    $region14: #{tpu_custom_call.1} parent=1 // pred_check
      _
    $region15: #{tpu_custom_call.1} parent=1 // pred_check_branch
      %18 = sbr.rel (0) target = $region17
    $region16: #{tpu_custom_call.1} parent=1 // pred_region
      _
    $region17: #{tpu_custom_call.1} parent=1 // pred_fallthru
      _
    // Predicated region
    $region18: #{tpu_custom_call.1} parent=1 // pred_check
      _
    $region19: #{tpu_custom_call.1} parent=1 // pred_check_branch
      %20 = sbr.rel (0) target = $region21
    $region20: #{tpu_custom_call.1} parent=1 // pred_region
      _
    $region21: #{tpu_custom_call.1} parent=1 // pred_fallthru
      _
    %p22 = scmp.eq.s32.totalorder 0, 0
    // Predicated region
    $region22: #{tpu_custom_call.1} parent=1 // pred_check
      %p23 = pneg %p22
    $region23: #{tpu_custom_call.1} parent=1 // pred_check_branch
      %25 = sbr.rel (%p23) target = $region25
    $region24: #{tpu_custom_call.1} parent=1 // pred_region
      %vm26 = vcmask 254976
      %27 = vst.msk [vmem:[#allocation2] sm:$0x3] %vm26, 0.0
    $region25: #{tpu_custom_call.1} parent=1 // pred_fallthru
      _
    %v28 = vld [vmem:[%s0] sm:$0xff]
    %v29 = vld [vmem:[%s0 + $0x8] sm:$0xff]
    %v30 = vld [vmem:[#allocation2] sm:$0x3]
    %vm31 = vcmask 261120
    %v32 = vsel %vm31, %v28, 0.0
    %v33 = vrot.slane %v32, 4
    %v34 = vadd.f32 %v32, %v33
    %v35 = vrot.slane %v34, 2
    %v36 = vadd.f32 %v34, %v35
    %v37 = vrot.slane %v36, 1
    %v38 = vadd.f32 %v36, %v37
    %v39 = vsel %vm31, %v29, 0.0
    %v40 = vrot.slane %v39, 4
    %v41 = vadd.f32 %v39, %v40
    %v42 = vrot.slane %v41, 2
    %v43 = vadd.f32 %v41, %v42
    %v44 = vrot.slane %v43, 1
    %v45 = vadd.f32 %v43, %v44
    %vm48 = vcmask 1041409
    %v49 = vsel %vm48, %v45, %v38
    %v51 = vadd.f32 %v30, %v49
    %vm52 = vcmask 254976
    %53 = vst.msk [vmem:[#allocation2] sm:$0x3] %vm52, %v51
    // Predicated region
    $region26: #{tpu_custom_call.1} parent=1 // pred_check
      %p54 = pneg %p22
    $region27: #{tpu_custom_call.1} parent=1 // pred_check_branch
      %56 = sbr.rel (%p54) target = $region29
    $region28: #{tpu_custom_call.1} parent=1 // pred_region
      %v57 = vld [vmem:[#allocation2] sm:$0x3]
      %v58 = vmul.f32 %v57, 0.125
      %v59 = vpack.c.bf16 %v58, %v58
      %v60 = vld [vmem:[%s1] sm:$0xf]
      %v61 = vld [vmem:[%s1 + $0x4] sm:$0xf]
      %v62 = vld [vmem:[%s1 + $0x8] sm:$0xf]
      %v63 = vld [vmem:[%s1 + $0xc] sm:$0xf]
      %v64 = vld [vmem:[%s2] sm:$0x1]
      %v66 = vperm.slane %v64, 0
      %v72 = vunpack.c.l.b16 %v60
      %v73 = vunpack.c.l.b16 %v61
      %v74 = vunpack.c.l.b16 %v62
      %v75 = vunpack.c.l.b16 %v63
      %v76 = vpack.c.b16 %v73, %v72
      %v77 = vpack.c.b16 %v75, %v74
      %v81 = vsel %vm31, %v59, 0
      %83 = vmatpush.bf16.msra.mxu0 0
      %84 = vmatpush.bf16.msra.mxu0 0
      %85 = vmatpush.bf16.msra.mxu0 0
      %86 = vmatpush.bf16.msra.mxu0 0
      %87 = vmatpush.bf16.msra.mxu0 0
      %88 = vmatpush.bf16.msra.mxu0 0
      %89 = vmatpush.bf16.msra.mxu0 %v77
      %90 = vmatpush.bf16.msra.mxu0 %v76
      %91 = vmatmul.bf16.gmra.mxu0 %v81
      %v92 = vpop.f32.mrf.mxu0
      %v93 = vadd.f32 %v66, %v92
      %v94 = vpop.f32.mrf.mxu0
      %95 = vdwg.mxu0
      %v96 = vmax.f32 %v93, 0.0
      %v97 = vpack.c.bf16 %v96, %v96
      %v98 = vld [vmem:[%s3] sm:$0xf]
      %v99 = vld [vmem:[%s3 + $0x4] sm:$0xf]
      %v100 = vld [vmem:[%s4] sm:$0x1]
      %v102 = vperm.slane %v100, 0
      %v106 = vunpack.c.l.b16 %v98
      %v107 = vunpack.c.l.b16 %v99
      %v108 = vpack.c.b16 %v107, %v106
      %vm110 = vcmask 130048
      %v112 = vsel %vm110, %v97, 0
      %114 = vmatpush.bf16.msra.mxu0 0
      %115 = vmatpush.bf16.msra.mxu0 0
      %116 = vmatpush.bf16.msra.mxu0 0
      %117 = vmatpush.bf16.msra.mxu0 0
      %118 = vmatpush.bf16.msra.mxu0 0
      %119 = vmatpush.bf16.msra.mxu0 0
      %120 = vmatpush.bf16.msra.mxu0 0
      %121 = vmatpush.bf16.msra.mxu0 %v108
      %122 = vmatmul.bf16.gmra.mxu0 %v112
      %v123 = vpop.f32.mrf.mxu0
      %v124 = vadd.f32 %v102, %v123
      %v125 = vpop.f32.mrf.mxu0
      %126 = vdwg.mxu0
      %v127 = vxor.u32 %v124, 2147483648
      %v128 = vmul.f32 %v127, 1.442695
      %v129 = vpow.pop %v128
      %v130 = vadd.f32 %v129, 1.0
      %v131 = vrcp.pop %v130
      %v132 = vmul.f32 %v130, %v131
      %v133 = vsub.f32 1.0, %v132
      %v134 = vmul.f32 %v131, %v133
      %v135 = vadd.f32 %v131, %v134
      %vm136 = vweird.f32 %v130
      %vm137 = vweird.f32 %v131
      %vm138 = vmor %vm136, %vm137
      %v139 = vsel %vm138, %v131, %v135
      %v140 = vand.u32 2147483647, %v130
      %vm141 = vcmp.eq.f32.partialorder %v140, 8.507059e+37
      %v142 = vand.u32 %v130, 2147483648
      %v143 = vor.u32 1.1754944e-38, %v142
      %v144 = vsel %vm141, %v143, %v139
      %v145 = vmul.f32 1.0, %v144
      %v146 = vlaneseq
      %v147 = vand.u32 %v146, 127
      %vm148 = vcmp.lt.s32.totalorder %v147, 2
      %v149 = vsel %vm148, 0.4, 0.3
      %v150 = vmul.f32 %v145, %v149
      %v151 = vadd.f32 %v150, 0.3
      %vm152 = vcmask 25600
      %153 = vst.msk [vmem:[#allocation3] sm:$0x3] %vm152, %v151
    $region29: #{tpu_custom_call.1} parent=1 // pred_fallthru
      _
    // Predicated region
    $region30: #{tpu_custom_call.1} parent=1 // pred_check
      _
    $region31: #{tpu_custom_call.1} parent=1 // pred_check_branch
      %155 = sbr.rel (0) target = $region33
    $region32: #{tpu_custom_call.1} parent=1 // pred_region
      %157 = vsyncadd [#allocation4], 0
      %s159 = sshll.u32 [#allocation3], 4
      %s160 = int_to_ptr.vmem [resolvable:$true] %s159
      %s161 = sshll.u32 %s5, 4
      %s162 = int_to_ptr.hbm [resolvable:$true] %s161
      %164 = dma.vmem_to_hbm [thread:$0]  %s160, 32, %s162, [#allocation4]
    $region33: #{tpu_custom_call.1} parent=1 // pred_fallthru
      _
    // Predicated region
    $region34: #{tpu_custom_call.1} parent=1 // pred_check
      _
    $region35: #{tpu_custom_call.1} parent=1 // pred_check_branch
      %166 = sbr.rel (0) target = $region37
    $region36: #{tpu_custom_call.1} parent=1 // pred_region
      %168 = dma.done [#allocation4], 32
    $region37: #{tpu_custom_call.1} parent=1 // pred_fallthru
      _
    %169 = vsyncpa [#allocation4], 1

</llo_original>
